<compile_context>
chip_gen: v6e
topology: v6e:2x2x1
jax: 0.10.0
libtpu: 0.0.40
codegen_flags: <defaults>
</compile_context>

<pallas_src>
import jax
import jax.numpy as jnp
from jax.experimental import pallas as pl
from jax.experimental.pallas import tpu as pltpu

# ---- problem sizes (small, consistent with the forward) ----
B = 2          # batch
C_IN = 4       # input channels
H = W = 16     # spatial
KH = KW = 3    # conv kernel
NUM_FTRS = 32  # backbone feature width (== pretrained.fc.in_features)
NUM_CLS = 2    # replaced fc: Linear(num_ftrs, 2)

HP, WP = H + 2, W + 2        # padded spatial dims ('same' 3x3 conv)
COLS = WP * C_IN             # 72   lanes per padded input row = (w', c)
K_RAW = KH * COLS            # 216  im2col contraction dim     = (kh, w', c)
K_PAD = 256                  # lane-aligned contraction dim
FW = W * NUM_FTRS            # 512  feature lanes              = (w, f)
ROWS = B * H                 # 32   output rows                = (b, h)
LANE = 128                   # lane-dense output width


def _fused_forward_kernel(x_ref, w2_ref, bconv_ref, pool_ref, g_ref, bfc_ref,
                          o_ref):
    """Single-invocation fused forward (whole batch).

    x_ref    : (ROWS, K_PAD)  vertically-im2col'd padded input, rows=(b,h),
                              lanes=(kh, w', c), zero lane-padded 216->256
    w2_ref   : (K_PAD, FW)    conv weight as one block-Toeplitz matrix
    bconv_ref: (1, FW)        conv bias tiled over w (lanes ordered (w, f))
    pool_ref : (B, ROWS)      0/1 per-image row-sum selector (GAP on the MXU;
                              the 1/(H*W) scale is folded into g_ref)
    g_ref    : (FW, LANE)     fc weight with pool scale folded in, zero
                              lane-padded from NUM_CLS to LANE
    bfc_ref  : (1, LANE)      fc bias, zero lane-padded
    o_ref    : (B, LANE)      padded logits (first NUM_CLS lanes are valid)
    """
    # conv as ONE MXU matmul (M=32 sublane-aligned, K=256, N=512).
    feat = jnp.dot(x_ref[...], w2_ref[...],
                   preferred_element_type=jnp.float32)            # (32, 512)

    # bias + ReLU in f32 on the VPU (v5e-safe: no bf16 elementwise).
    feat = jnp.maximum(feat + bconv_ref[...], 0.0)

    # global average pool on the MXU: per-image row-sum via the precomputed
    # 0/1 selector (no cross-sublane reduce, no per-call iota/where).
    hsum = jnp.dot(pool_ref[...], feat,
                   preferred_element_type=jnp.float32)            # (B, 512)

    # replaced fc head (Linear(num_ftrs, 2)), lane-dense (B, LANE) store.
    o_ref[...] = (jnp.dot(hsum, g_ref[...],
                          preferred_element_type=jnp.float32)
                  + bfc_ref[...])


def prepare_params(conv_w, conv_b, fc_w, fc_b):
    """ONE-TIME weight packing (hoisted out of the per-call forward).

    conv_w: (NUM_FTRS, C_IN, KH, KW)   PyTorch conv layout
    conv_b: (NUM_FTRS,)
    fc_w  : (NUM_CLS, NUM_FTRS)        PyTorch linear layout
    fc_b  : (NUM_CLS,)
    """
    # Block-Toeplitz conv weight so the kernel never materializes im2col
    # patches beyond the cheap vertical stack done in the forward:
    #   w2[kh*COLS + w'*C + c, w*F + f] = conv_w[f, c, kh, w'-w], 0 <= w'-w < KW
    A = jnp.transpose(conv_w, (2, 3, 1, 0)).astype(jnp.float32)    # (KH,KW,C,F)
    r = jnp.arange(COLS)
    col = jnp.arange(FW)
    w_in, c_in = r // C_IN, r % C_IN
    w_out, f_out = col // NUM_FTRS, col % NUM_FTRS
    kw = w_in[:, None] - w_out[None, :]
    valid = (kw >= 0) & (kw < KW)
    kw_c = jnp.clip(kw, 0, KW - 1)
    wtop = jnp.where(valid[None],
                     A[:, kw_c, c_in[:, None], f_out[None, :]],
                     0.0)                                           # (KH,COLS,FW)
    w2 = jnp.pad(wtop.reshape(K_RAW, FW),
                 ((0, K_PAD - K_RAW), (0, 0)))                      # (256, 512)

    bconv = jnp.tile(conv_b.astype(jnp.float32), W)[None, :]        # (1, FW)

    # fc weight with the 1/(H*W) global-average-pool scale folded in.
    g = jnp.tile(fc_w.T.astype(jnp.float32), (W, 1)) / float(H * W) # (FW, 2)
    g = jnp.pad(g, ((0, 0), (0, LANE - NUM_CLS)))                   # (FW, LANE)
    bfc = jnp.pad(fc_b.astype(jnp.float32),
                  (0, LANE - NUM_CLS))[None, :]                     # (1, LANE)

    # (B, B*H) 0/1 per-image pooling selector (precomputed constant input).
    pool = (jax.lax.broadcasted_iota(jnp.int32, (B, ROWS), 1) // H
            == jax.lax.broadcasted_iota(jnp.int32, (B, ROWS), 0)
            ).astype(jnp.float32)                                   # (B, ROWS)

    return w2, bconv, pool, g, bfc


@jax.jit
def model_arch_forward(x_nchw, w2, bconv, pool, g, bfc):
    """x_nchw: (B, C_IN, H, W) float32 -> logits (B, NUM_CLS)."""
    # ---- light per-call glue: NCHW -> NHWC, zero-pad, vertical im2col ----
    x = jnp.transpose(x_nchw, (0, 2, 3, 1)).astype(jnp.float32)     # (B,H,W,C)
    xp = jnp.pad(x, ((0, 0), (1, 1), (1, 1), (0, 0)))               # (B,HP,WP,C)
    # x2[b*H + h, kh*COLS + w'*C + c] = xp[b, h+kh, w', c]
    x2 = jnp.stack([xp[:, kh:kh + H].reshape(B, H, COLS)
                    for kh in range(KH)], axis=2).reshape(ROWS, K_RAW)
    x2 = jnp.pad(x2, ((0, 0), (0, K_PAD - K_RAW)))                  # (32, 256)

    out_pad = pl.pallas_call(
        _fused_forward_kernel,
        out_shape=jax.ShapeDtypeStruct((B, LANE), jnp.float32),
        in_specs=[pl.BlockSpec(memory_space=pltpu.MemorySpace.VMEM)] * 6,
        out_specs=pl.BlockSpec(memory_space=pltpu.MemorySpace.VMEM),
    )(x2, w2, bconv, pool, g, bfc)

    return out_pad[:, :NUM_CLS]


def _jax_reference(x_nchw, conv_w, conv_b, fc_w, fc_b):
    x = jnp.transpose(x_nchw, (0, 2, 3, 1))
    xp = jnp.pad(x, ((0, 0), (1, 1), (1, 1), (0, 0)))
    patches = jnp.stack(
        [xp[:, kh:kh + H, kw:kw + W, :] for kh in range(KH) for kw in range(KW)],
        axis=3,
    ).reshape(x.shape[0], H * W, KH * KW * C_IN)
    wc = jnp.transpose(conv_w, (2, 3, 1, 0)).reshape(KH * KW * C_IN, NUM_FTRS)
    feat = jnp.maximum(patches @ wc + conv_b[None, None, :], 0.0)
    pooled = feat.mean(axis=1)
    return pooled @ fc_w.T + fc_b[None, :]


if __name__ == "__main__":
    key = jax.random.PRNGKey(0)
    k_x, k_cw, k_cb, k_fw, k_fb = jax.random.split(key, 5)

    x = jax.random.normal(k_x, (B, C_IN, H, W), dtype=jnp.float32)
    conv_w = jax.random.normal(k_cw, (NUM_FTRS, C_IN, KH, KW),
                               dtype=jnp.float32) * 0.1
    conv_b = jax.random.normal(k_cb, (NUM_FTRS,), dtype=jnp.float32) * 0.1
    fc_w = jax.random.normal(k_fw, (NUM_CLS, NUM_FTRS), dtype=jnp.float32) * 0.1
    fc_b = jax.random.normal(k_fb, (NUM_CLS,), dtype=jnp.float32) * 0.1

    # One-time weight packing ("model init"), kept out of the per-call forward.
    packed = prepare_params(conv_w, conv_b, fc_w, fc_b)
    packed = jax.tree_util.tree_map(jax.block_until_ready, packed)

    logits = model_arch_forward(x, *packed)
    jax.block_until_ready(logits)

    ref = _jax_reference(x, conv_w, conv_b, fc_w, fc_b)
    assert logits.shape == (B, NUM_CLS)
    assert jnp.allclose(logits, ref, atol=1e-4, rtol=1e-4), "mismatch vs JAX reference"

    print("KERNEL_OK")
</pallas_src>

<mosaic_0001>
module attributes {stable_mosaic.version = 11 : i64} {
  func.func @_fused_forward_kernel(%arg0: memref<32x256xf32, #tpu.memory_space<vmem>>, %arg1: memref<256x512xf32, #tpu.memory_space<vmem>>, %arg2: memref<1x512xf32, #tpu.memory_space<vmem>>, %arg3: memref<2x32xf32, #tpu.memory_space<vmem>>, %arg4: memref<512x128xf32, #tpu.memory_space<vmem>>, %arg5: memref<1x128xf32, #tpu.memory_space<vmem>>, %arg6: memref<2x128xf32, #tpu.memory_space<vmem>>) attributes {dimension_semantics = [], scalar_prefetch = 0 : i64, scratch_operands = 0 : i64, tpu.core_type = #tpu.core_type<tc>} {
    %c0 = arith.constant 0 : index
    %c0_0 = arith.constant 0 : index
    %0 = vector.load %arg0[%c0, %c0_0] : memref<32x256xf32, #tpu.memory_space<vmem>>, vector<32x256xf32>
    %c0_1 = arith.constant 0 : index
    %c0_2 = arith.constant 0 : index
    %1 = vector.load %arg1[%c0_1, %c0_2] : memref<256x512xf32, #tpu.memory_space<vmem>>, vector<256x512xf32>
    %cst = arith.constant dense<0.000000e+00> : vector<32x512xf32>
    %2 = tpu.matmul %0, %1, %cst {dimension_numbers = #tpu.dot_dimension_numbers<[1], [0], [0], [1], [0, 0, 1, 1], [], []>} : vector<32x256xf32>, vector<256x512xf32>, vector<32x512xf32> -> vector<32x512xf32>
    %c0_3 = arith.constant 0 : index
    %c0_4 = arith.constant 0 : index
    %3 = vector.load %arg2[%c0_3, %c0_4] : memref<1x512xf32, #tpu.memory_space<vmem>>, vector<1x512xf32>
    %4 = vector.broadcast %3 : vector<1x512xf32> to vector<32x512xf32>
    %5 = arith.addf %2, %4 : vector<32x512xf32>
    %cst_5 = arith.constant 0.000000e+00 : f32
    %6 = vector.broadcast %cst_5 : f32 to vector<32x512xf32>
    %7 = arith.maximumf %5, %6 : vector<32x512xf32>
    %c0_6 = arith.constant 0 : index
    %c0_7 = arith.constant 0 : index
    %8 = vector.load %arg3[%c0_6, %c0_7] : memref<2x32xf32, #tpu.memory_space<vmem>>, vector<2x32xf32>
    %cst_8 = arith.constant dense<0.000000e+00> : vector<2x512xf32>
    %9 = tpu.matmul %8, %7, %cst_8 {dimension_numbers = #tpu.dot_dimension_numbers<[1], [0], [0], [1], [0, 0, 1, 1], [], []>} : vector<2x32xf32>, vector<32x512xf32>, vector<2x512xf32> -> vector<2x512xf32>
    %c0_9 = arith.constant 0 : index
    %c0_10 = arith.constant 0 : index
    %10 = vector.load %arg4[%c0_9, %c0_10] : memref<512x128xf32, #tpu.memory_space<vmem>>, vector<512x128xf32>
    %cst_11 = arith.constant dense<0.000000e+00> : vector<2x128xf32>
    %11 = tpu.matmul %9, %10, %cst_11 {dimension_numbers = #tpu.dot_dimension_numbers<[1], [0], [0], [1], [0, 0, 1, 1], [], []>} : vector<2x512xf32>, vector<512x128xf32>, vector<2x128xf32> -> vector<2x128xf32>
    %c0_12 = arith.constant 0 : index
    %c0_13 = arith.constant 0 : index
    %12 = vector.load %arg5[%c0_12, %c0_13] : memref<1x128xf32, #tpu.memory_space<vmem>>, vector<1x128xf32>
    %13 = vector.broadcast %12 : vector<1x128xf32> to vector<2x128xf32>
    %14 = arith.addf %11, %13 : vector<2x128xf32>
    %c0_14 = arith.constant 0 : index
    %c0_15 = arith.constant 0 : index
    %15 = vector.load %arg6[%c0_14, %c0_15] : memref<2x128xf32, #tpu.memory_space<vmem>>, vector<2x128xf32>
    tpu.vector_store %arg6[%c0_14, %c0_15], %14 {strides = array<i32>} : memref<2x128xf32, #tpu.memory_space<vmem>>, vector<2x128xf32>,
    return
  }
}

</mosaic_0001>

<llo_original>
// kernel: model_arch_forward.1
$region0: #{model_arch_forward.1}
  #allocation0 [shape = 'u32[]', space=smem, size = 0x4, offset = 0x4, fixed_abs, tag = 'smem constant byte address 0x4 - core index']
  #allocation1 [shape = 'u32[144,128]{1,0:T(1,128)}', space=vmem, size = 0x12000, scoped, tag = 'internal scratch']
  %s0 = inlined_call_operand.vmem [shape: f32[32,256], index: 0, kind: input, shape index: {}]
  %s1 = inlined_call_operand.vmem [shape: f32[256,512], index: 1, kind: input, shape index: {}]
  %s2 = inlined_call_operand.vmem [shape: f32[1,512], index: 2, kind: input, shape index: {}]
  %s3 = inlined_call_operand.vmem [shape: f32[2,32], index: 3, kind: input, shape index: {}]
  %s4 = inlined_call_operand.vmem [shape: f32[512,128], index: 4, kind: input, shape index: {}]
  %s5 = inlined_call_operand.vmem [shape: f32[1,128], index: 5, kind: input, shape index: {}]
  %s6 = inlined_call_operand.hbm [shape: f32[2,128], index: 6, kind: output, shape index: {}]
  %s7 = sld [smem:[#allocation0]]
  $region34: #{model_arch_forward.1} parent=0
    _
  %s9 = ssub.s32 1, %s7
  %s10 = scalar_select 0, %s9, %s7
  $region1: #{model_arch_forward.1} parent=0
    #allocation2 [shape = 'u8[1024]{0}', space=vmem, size = 0x400, scoped, tag = 'output window, operand 0, single buffered']
    #allocation3 [shape = 's32[1]{0}', space=sflag, size = 0x4, scoped, tag = 'scoped memory for model_arch_forward.1']
    %11 = vsyncpa [#allocation3], 0
    // Predicated region
    $region2: #{model_arch_forward.1} parent=1 // pred_check
      _
    $region3: #{model_arch_forward.1} parent=1 // pred_check_branch
      %13 = sbr.rel (0) target = $region5
    $region4: #{model_arch_forward.1} parent=1 // pred_region
      _
    $region5: #{model_arch_forward.1} parent=1 // pred_fallthru
      _
    // Predicated region
    $region6: #{model_arch_forward.1} parent=1 // pred_check
      _
    $region7: #{model_arch_forward.1} parent=1 // pred_check_branch
      %15 = sbr.rel (0) target = $region9
    $region8: #{model_arch_forward.1} parent=1 // pred_region
      _
    $region9: #{model_arch_forward.1} parent=1 // pred_fallthru
      _
    // Predicated region
    $region10: #{model_arch_forward.1} parent=1 // pred_check
      _
    $region11: #{model_arch_forward.1} parent=1 // pred_check_branch
      %17 = sbr.rel (0) target = $region13
    $region12: #{model_arch_forward.1} parent=1 // pred_region
      _
    $region13: #{model_arch_forward.1} parent=1 // pred_fallthru
      _
    // Predicated region
    $region14: #{model_arch_forward.1} parent=1 // pred_check
      _
    $region15: #{model_arch_forward.1} parent=1 // pred_check_branch
      %19 = sbr.rel (0) target = $region17
    $region16: #{model_arch_forward.1} parent=1 // pred_region
      _
    $region17: #{model_arch_forward.1} parent=1 // pred_fallthru
      _
    // Predicated region
    $region18: #{model_arch_forward.1} parent=1 // pred_check
      _
    $region19: #{model_arch_forward.1} parent=1 // pred_check_branch
      %21 = sbr.rel (0) target = $region21
    $region20: #{model_arch_forward.1} parent=1 // pred_region
      _
    $region21: #{model_arch_forward.1} parent=1 // pred_fallthru
      _
    // Predicated region
    $region22: #{model_arch_forward.1} parent=1 // pred_check
      _
    $region23: #{model_arch_forward.1} parent=1 // pred_check_branch
      %23 = sbr.rel (0) target = $region25
    $region24: #{model_arch_forward.1} parent=1 // pred_region
      _
    $region25: #{model_arch_forward.1} parent=1 // pred_fallthru
      _
    %v24 = vld [vmem:[%s0] sm:$0xff]
    %v25 = vld [vmem:[%s0 + $0x8] sm:$0xff]
    %v26 = vld [vmem:[%s0 + $0x10] sm:$0xff]
    %v27 = vld [vmem:[%s0 + $0x18] sm:$0xff]
    %v28 = vld [vmem:[%s0 + $0x20] sm:$0xff]
    %v29 = vld [vmem:[%s0 + $0x28] sm:$0xff]
    %v30 = vld [vmem:[%s0 + $0x30] sm:$0xff]
    %v31 = vld [vmem:[%s0 + $0x38] sm:$0xff]
    %v32 = vld [vmem:[%s1] sm:$0xff]
    %v33 = vld [vmem:[%s1 + $0x8] sm:$0xff]
    %v34 = vld [vmem:[%s1 + $0x10] sm:$0xff]
    %v35 = vld [vmem:[%s1 + $0x18] sm:$0xff]
    %v36 = vld [vmem:[%s1 + $0x20] sm:$0xff]
    %v37 = vld [vmem:[%s1 + $0x28] sm:$0xff]
    %v38 = vld [vmem:[%s1 + $0x30] sm:$0xff]
    %v39 = vld [vmem:[%s1 + $0x38] sm:$0xff]
    %v40 = vld [vmem:[%s1 + $0x40] sm:$0xff]
    %v41 = vld [vmem:[%s1 + $0x48] sm:$0xff]
    %v42 = vld [vmem:[%s1 + $0x50] sm:$0xff]
    %v43 = vld [vmem:[%s1 + $0x58] sm:$0xff]
    %v44 = vld [vmem:[%s1 + $0x60] sm:$0xff]
    %v45 = vld [vmem:[%s1 + $0x68] sm:$0xff]
    %v46 = vld [vmem:[%s1 + $0x70] sm:$0xff]
    %v47 = vld [vmem:[%s1 + $0x78] sm:$0xff]
    %v48 = vld [vmem:[%s1 + $0x80] sm:$0xff]
    %v49 = vld [vmem:[%s1 + $0x88] sm:$0xff]
    %v50 = vld [vmem:[%s1 + $0x90] sm:$0xff]
    %v51 = vld [vmem:[%s1 + $0x98] sm:$0xff]
    %v52 = vld [vmem:[%s1 + $0xa0] sm:$0xff]
    %v53 = vld [vmem:[%s1 + $0xa8] sm:$0xff]
    %v54 = vld [vmem:[%s1 + $0xb0] sm:$0xff]
    %v55 = vld [vmem:[%s1 + $0xb8] sm:$0xff]
    %v56 = vld [vmem:[%s1 + $0xc0] sm:$0xff]
    %v57 = vld [vmem:[%s1 + $0xc8] sm:$0xff]
    %v58 = vld [vmem:[%s1 + $0xd0] sm:$0xff]
    %v59 = vld [vmem:[%s1 + $0xd8] sm:$0xff]
    %v60 = vld [vmem:[%s1 + $0xe0] sm:$0xff]
    %v61 = vld [vmem:[%s1 + $0xe8] sm:$0xff]
    %v62 = vld [vmem:[%s1 + $0xf0] sm:$0xff]
    %v63 = vld [vmem:[%s1 + $0xf8] sm:$0xff]
    %v64 = vld [vmem:[%s1 + $0x100] sm:$0xff]
    %v65 = vld [vmem:[%s1 + $0x108] sm:$0xff]
    %v66 = vld [vmem:[%s1 + $0x110] sm:$0xff]
    %v67 = vld [vmem:[%s1 + $0x118] sm:$0xff]
    %v68 = vld [vmem:[%s1 + $0x120] sm:$0xff]
    %v69 = vld [vmem:[%s1 + $0x128] sm:$0xff]
    %v70 = vld [vmem:[%s1 + $0x130] sm:$0xff]
    %v71 = vld [vmem:[%s1 + $0x138] sm:$0xff]
    %v72 = vld [vmem:[%s1 + $0x140] sm:$0xff]
    %v73 = vld [vmem:[%s1 + $0x148] sm:$0xff]
    %v74 = vld [vmem:[%s1 + $0x150] sm:$0xff]
    %v75 = vld [vmem:[%s1 + $0x158] sm:$0xff]
    %v76 = vld [vmem:[%s1 + $0x160] sm:$0xff]
    %v77 = vld [vmem:[%s1 + $0x168] sm:$0xff]
    %v78 = vld [vmem:[%s1 + $0x170] sm:$0xff]
    %v79 = vld [vmem:[%s1 + $0x178] sm:$0xff]
    %v80 = vld [vmem:[%s1 + $0x180] sm:$0xff]
    %v81 = vld [vmem:[%s1 + $0x188] sm:$0xff]
    %v82 = vld [vmem:[%s1 + $0x190] sm:$0xff]
    %v83 = vld [vmem:[%s1 + $0x198] sm:$0xff]
    %v84 = vld [vmem:[%s1 + $0x1a0] sm:$0xff]
    %v85 = vld [vmem:[%s1 + $0x1a8] sm:$0xff]
    %v86 = vld [vmem:[%s1 + $0x1b0] sm:$0xff]
    %v87 = vld [vmem:[%s1 + $0x1b8] sm:$0xff]
    %v88 = vld [vmem:[%s1 + $0x1c0] sm:$0xff]
    %v89 = vld [vmem:[%s1 + $0x1c8] sm:$0xff]
    %v90 = vld [vmem:[%s1 + $0x1d0] sm:$0xff]
    %v91 = vld [vmem:[%s1 + $0x1d8] sm:$0xff]
    %v92 = vld [vmem:[%s1 + $0x1e0] sm:$0xff]
    %v93 = vld [vmem:[%s1 + $0x1e8] sm:$0xff]
    %v94 = vld [vmem:[%s1 + $0x1f0] sm:$0xff]
    %v95 = vld [vmem:[%s1 + $0x1f8] sm:$0xff]
    %v96 = vld [vmem:[%s1 + $0x200] sm:$0xff]
    %v97 = vld [vmem:[%s1 + $0x208] sm:$0xff]
    %v98 = vld [vmem:[%s1 + $0x210] sm:$0xff]
    %v99 = vld [vmem:[%s1 + $0x218] sm:$0xff]
    %v100 = vld [vmem:[%s1 + $0x220] sm:$0xff]
    %v101 = vld [vmem:[%s1 + $0x228] sm:$0xff]
    %v102 = vld [vmem:[%s1 + $0x230] sm:$0xff]
    %v103 = vld [vmem:[%s1 + $0x238] sm:$0xff]
    %v104 = vld [vmem:[%s1 + $0x240] sm:$0xff]
    %v105 = vld [vmem:[%s1 + $0x248] sm:$0xff]
    %v106 = vld [vmem:[%s1 + $0x250] sm:$0xff]
    %v107 = vld [vmem:[%s1 + $0x258] sm:$0xff]
    %v108 = vld [vmem:[%s1 + $0x260] sm:$0xff]
    %v109 = vld [vmem:[%s1 + $0x268] sm:$0xff]
    %v110 = vld [vmem:[%s1 + $0x270] sm:$0xff]
    %v111 = vld [vmem:[%s1 + $0x278] sm:$0xff]
    %v112 = vld [vmem:[%s1 + $0x280] sm:$0xff]
    %v113 = vld [vmem:[%s1 + $0x288] sm:$0xff]
    %v114 = vld [vmem:[%s1 + $0x290] sm:$0xff]
    %v115 = vld [vmem:[%s1 + $0x298] sm:$0xff]
    %v116 = vld [vmem:[%s1 + $0x2a0] sm:$0xff]
    %v117 = vld [vmem:[%s1 + $0x2a8] sm:$0xff]
    %v118 = vld [vmem:[%s1 + $0x2b0] sm:$0xff]
    %v119 = vld [vmem:[%s1 + $0x2b8] sm:$0xff]
    %v120 = vld [vmem:[%s1 + $0x2c0] sm:$0xff]
    %v121 = vld [vmem:[%s1 + $0x2c8] sm:$0xff]
    %v122 = vld [vmem:[%s1 + $0x2d0] sm:$0xff]
    %v123 = vld [vmem:[%s1 + $0x2d8] sm:$0xff]
    %v124 = vld [vmem:[%s1 + $0x2e0] sm:$0xff]
    %v125 = vld [vmem:[%s1 + $0x2e8] sm:$0xff]
    %v126 = vld [vmem:[%s1 + $0x2f0] sm:$0xff]
    %v127 = vld [vmem:[%s1 + $0x2f8] sm:$0xff]
    %v128 = vld [vmem:[%s1 + $0x300] sm:$0xff]
    %v129 = vld [vmem:[%s1 + $0x308] sm:$0xff]
    %v130 = vld [vmem:[%s1 + $0x310] sm:$0xff]
    %v131 = vld [vmem:[%s1 + $0x318] sm:$0xff]
    %v132 = vld [vmem:[%s1 + $0x320] sm:$0xff]
    %v133 = vld [vmem:[%s1 + $0x328] sm:$0xff]
    %v134 = vld [vmem:[%s1 + $0x330] sm:$0xff]
    %v135 = vld [vmem:[%s1 + $0x338] sm:$0xff]
    %v136 = vld [vmem:[%s1 + $0x340] sm:$0xff]
    %v137 = vld [vmem:[%s1 + $0x348] sm:$0xff]
    %v138 = vld [vmem:[%s1 + $0x350] sm:$0xff]
    %v139 = vld [vmem:[%s1 + $0x358] sm:$0xff]
    %v140 = vld [vmem:[%s1 + $0x360] sm:$0xff]
    %v141 = vld [vmem:[%s1 + $0x368] sm:$0xff]
    %v142 = vld [vmem:[%s1 + $0x370] sm:$0xff]
    %v143 = vld [vmem:[%s1 + $0x378] sm:$0xff]
    %v144 = vld [vmem:[%s1 + $0x380] sm:$0xff]
    %v145 = vld [vmem:[%s1 + $0x388] sm:$0xff]
    %v146 = vld [vmem:[%s1 + $0x390] sm:$0xff]
    %v147 = vld [vmem:[%s1 + $0x398] sm:$0xff]
    %v148 = vld [vmem:[%s1 + $0x3a0] sm:$0xff]
    %v149 = vld [vmem:[%s1 + $0x3a8] sm:$0xff]
    %v150 = vld [vmem:[%s1 + $0x3b0] sm:$0xff]
    %v151 = vld [vmem:[%s1 + $0x3b8] sm:$0xff]
    %v152 = vld [vmem:[%s1 + $0x3c0] sm:$0xff]
    %v153 = vld [vmem:[%s1 + $0x3c8] sm:$0xff]
    %v154 = vld [vmem:[%s1 + $0x3d0] sm:$0xff]
    %v155 = vld [vmem:[%s1 + $0x3d8] sm:$0xff]
    %v156 = vld [vmem:[%s1 + $0x3e0] sm:$0xff]
    %v157 = vld [vmem:[%s1 + $0x3e8] sm:$0xff]
    %v158 = vld [vmem:[%s1 + $0x3f0] sm:$0xff]
    %v159 = vld [vmem:[%s1 + $0x3f8] sm:$0xff]
    %v160 = vld [vmem:[%s2] sm:$0xf]
    %v162 = vlaneseq
    %v163 = vshrl.u32 %v162, 7
    %v164 = vsub.s32 0, %v163
    %v165 = vrot.slane %v160, %v164
    %v166 = vlaneseq
    %v167 = vshrl.u32 %v166, 7
    %v168 = vsub.s32 1, %v167
    %v169 = vrot.slane %v160, %v168
    %v170 = vlaneseq
    %v171 = vshrl.u32 %v170, 7
    %v172 = vsub.s32 2, %v171
    %v173 = vrot.slane %v160, %v172
    %v174 = vlaneseq
    %v175 = vshrl.u32 %v174, 7
    %v176 = vsub.s32 3, %v175
    %v177 = vrot.slane %v160, %v176
    %182 = vmatprep.subr.mxu0 %v93
    %183 = vmatpush1.msra.mxu0 %v92
    %184 = vmatprep.subr.mxu0 %v89
    %185 = vmatpush1.msra.mxu0 %v88
    %186 = vmatprep.subr.mxu0 %v85
    %187 = vmatpush1.msra.mxu0 %v84
    %188 = vmatprep.subr.mxu0 %v81
    %189 = vmatpush1.msra.mxu0 %v80
    %190 = vmatprep.subr.mxu0 %v77
    %191 = vmatpush1.msra.mxu0 %v76
    %192 = vmatprep.subr.mxu0 %v73
    %193 = vmatpush1.msra.mxu0 %v72
    %194 = vmatprep.subr.mxu0 %v69
    %195 = vmatpush1.msra.mxu0 %v68
    %196 = vmatprep.subr.mxu0 %v65
    %197 = vmatpush1.msra.mxu0 %v64
    %198 = vmatprep.subr.mxu0 %v61
    %199 = vmatpush1.msra.mxu0 %v60
    %200 = vmatprep.subr.mxu0 %v57
    %201 = vmatpush1.msra.mxu0 %v56
    %202 = vmatprep.subr.mxu0 %v53
    %203 = vmatpush1.msra.mxu0 %v52
    %204 = vmatprep.subr.mxu0 %v49
    %205 = vmatpush1.msra.mxu0 %v48
    %206 = vmatprep.subr.mxu0 %v45
    %207 = vmatpush1.msra.mxu0 %v44
    %208 = vmatprep.subr.mxu0 %v41
    %209 = vmatpush1.msra.mxu0 %v40
    %210 = vmatprep.subr.mxu0 %v37
    %211 = vmatpush1.msra.mxu0 %v36
    %212 = vmatprep.subr.mxu0 %v33
    %213 = vmatpush1.msra.mxu0 %v32
    %214 = vmatprep.subr.mxu0 %v157
    %215 = vmatpush2.msra.mxu0 %v156
    %216 = vmatprep.subr.mxu0 %v153
    %217 = vmatpush2.msra.mxu0 %v152
    %218 = vmatprep.subr.mxu0 %v149
    %219 = vmatpush2.msra.mxu0 %v148
    %220 = vmatprep.subr.mxu0 %v145
    %221 = vmatpush2.msra.mxu0 %v144
    %222 = vmatprep.subr.mxu0 %v141
    %223 = vmatpush2.msra.mxu0 %v140
    %224 = vmatprep.subr.mxu0 %v137
    %225 = vmatpush2.msra.mxu0 %v136
    %226 = vmatprep.subr.mxu0 %v133
    %227 = vmatpush2.msra.mxu0 %v132
    %228 = vmatprep.subr.mxu0 %v129
    %229 = vmatpush2.msra.mxu0 %v128
    %230 = vmatprep.subr.mxu0 %v125
    %231 = vmatpush2.msra.mxu0 %v124
    %232 = vmatprep.subr.mxu0 %v121
    %233 = vmatpush2.msra.mxu0 %v120
    %234 = vmatprep.subr.mxu0 %v117
    %235 = vmatpush2.msra.mxu0 %v116
    %236 = vmatprep.subr.mxu0 %v113
    %237 = vmatpush2.msra.mxu0 %v112
    %238 = vmatprep.subr.mxu0 %v109
    %239 = vmatpush2.msra.mxu0 %v108
    %240 = vmatprep.subr.mxu0 %v105
    %241 = vmatpush2.msra.mxu0 %v104
    %242 = vmatprep.subr.mxu0 %v101
    %243 = vmatpush2.msra.mxu0 %v100
    %244 = vmatprep.subr.mxu0 %v97
    %245 = vmatpush2.msra.mxu0 %v96
    %246 = vmatprep.mubr.f32.mxu0 %v25
    %247 = vmatmul.mubr.f32.gmra.mxu0 %v24
    %v248 = vpop.f32.mrf.mxu0
    %v249 = vadd.f32 %v165, %v248
    %v250 = vpop.f32.mrf.mxu0
    %v251 = vadd.f32 %v169, %v250
    %252 = vmatprep.mubr.f32.mxu0 %v27
    %253 = vmatmul.mubr.f32.gmra.mxu0 %v26
    %v254 = vpop.f32.mrf.mxu0
    %v255 = vadd.f32 %v165, %v254
    %v256 = vpop.f32.mrf.mxu0
    %v257 = vadd.f32 %v169, %v256
    %258 = vmatprep.mubr.f32.mxu0 %v29
    %259 = vmatmul.mubr.f32.gmra.mxu0 %v28
    %v260 = vpop.f32.mrf.mxu0
    %v261 = vadd.f32 %v165, %v260
    %v262 = vpop.f32.mrf.mxu0
    %v263 = vadd.f32 %v169, %v262
    %264 = vmatprep.mubr.f32.mxu0 %v31
    %265 = vmatmul.mubr.f32.gmra.mxu0 %v30
    %v266 = vpop.f32.mrf.mxu0
    %v267 = vadd.f32 %v165, %v266
    %v268 = vpop.f32.mrf.mxu0
    %v269 = vadd.f32 %v169, %v268
    %270 = vdwg.mxu0
    %271 = vmatprep.subr.mxu0 %v95
    %272 = vmatpush1.msra.mxu0 %v94
    %273 = vmatprep.subr.mxu0 %v91
    %274 = vmatpush1.msra.mxu0 %v90
    %275 = vmatprep.subr.mxu0 %v87
    %276 = vmatpush1.msra.mxu0 %v86
    %277 = vmatprep.subr.mxu0 %v83
    %278 = vmatpush1.msra.mxu0 %v82
    %279 = vmatprep.subr.mxu0 %v79
    %280 = vmatpush1.msra.mxu0 %v78
    %281 = vmatprep.subr.mxu0 %v75
    %282 = vmatpush1.msra.mxu0 %v74
    %283 = vmatprep.subr.mxu0 %v71
    %284 = vmatpush1.msra.mxu0 %v70
    %285 = vmatprep.subr.mxu0 %v67
    %286 = vmatpush1.msra.mxu0 %v66
    %287 = vmatprep.subr.mxu0 %v63
    %288 = vmatpush1.msra.mxu0 %v62
    %289 = vmatprep.subr.mxu0 %v59
    %290 = vmatpush1.msra.mxu0 %v58
    %291 = vmatprep.subr.mxu0 %v55
    %292 = vmatpush1.msra.mxu0 %v54
    %293 = vmatprep.subr.mxu0 %v51
    %294 = vmatpush1.msra.mxu0 %v50
    %295 = vmatprep.subr.mxu0 %v47
    %296 = vmatpush1.msra.mxu0 %v46
    %297 = vmatprep.subr.mxu0 %v43
    %298 = vmatpush1.msra.mxu0 %v42
    %299 = vmatprep.subr.mxu0 %v39
    %300 = vmatpush1.msra.mxu0 %v38
    %301 = vmatprep.subr.mxu0 %v35
    %302 = vmatpush1.msra.mxu0 %v34
    %303 = vmatprep.subr.mxu0 %v159
    %304 = vmatpush2.msra.mxu0 %v158
    %305 = vmatprep.subr.mxu0 %v155
    %306 = vmatpush2.msra.mxu0 %v154
    %307 = vmatprep.subr.mxu0 %v151
    %308 = vmatpush2.msra.mxu0 %v150
    %309 = vmatprep.subr.mxu0 %v147
    %310 = vmatpush2.msra.mxu0 %v146
    %311 = vmatprep.subr.mxu0 %v143
    %312 = vmatpush2.msra.mxu0 %v142
    %313 = vmatprep.subr.mxu0 %v139
    %314 = vmatpush2.msra.mxu0 %v138
    %315 = vmatprep.subr.mxu0 %v135
    %316 = vmatpush2.msra.mxu0 %v134
    %317 = vmatprep.subr.mxu0 %v131
    %318 = vmatpush2.msra.mxu0 %v130
    %319 = vmatprep.subr.mxu0 %v127
    %320 = vmatpush2.msra.mxu0 %v126
    %321 = vmatprep.subr.mxu0 %v123
    %322 = vmatpush2.msra.mxu0 %v122
    %323 = vmatprep.subr.mxu0 %v119
    %324 = vmatpush2.msra.mxu0 %v118
    %325 = vmatprep.subr.mxu0 %v115
    %326 = vmatpush2.msra.mxu0 %v114
    %327 = vmatprep.subr.mxu0 %v111
    %328 = vmatpush2.msra.mxu0 %v110
    %329 = vmatprep.subr.mxu0 %v107
    %330 = vmatpush2.msra.mxu0 %v106
    %331 = vmatprep.subr.mxu0 %v103
    %332 = vmatpush2.msra.mxu0 %v102
    %333 = vmatprep.subr.mxu0 %v99
    %334 = vmatpush2.msra.mxu0 %v98
    %335 = vmatprep.mubr.f32.mxu0 %v25
    %336 = vmatmul.mubr.f32.gmra.mxu0 %v24
    %v337 = vpop.f32.mrf.mxu0
    %v338 = vadd.f32 %v173, %v337
    %v339 = vpop.f32.mrf.mxu0
    %v340 = vadd.f32 %v177, %v339
    %341 = vmatprep.mubr.f32.mxu0 %v27
    %342 = vmatmul.mubr.f32.gmra.mxu0 %v26
    %v343 = vpop.f32.mrf.mxu0
    %v344 = vadd.f32 %v173, %v343
    %v345 = vpop.f32.mrf.mxu0
    %v346 = vadd.f32 %v177, %v345
    %347 = vmatprep.mubr.f32.mxu0 %v29
    %348 = vmatmul.mubr.f32.gmra.mxu0 %v28
    %v349 = vpop.f32.mrf.mxu0
    %v350 = vadd.f32 %v173, %v349
    %v351 = vpop.f32.mrf.mxu0
    %v352 = vadd.f32 %v177, %v351
    %353 = vmatprep.mubr.f32.mxu0 %v31
    %354 = vmatmul.mubr.f32.gmra.mxu0 %v30
    %v355 = vpop.f32.mrf.mxu0
    %v356 = vadd.f32 %v173, %v355
    %v357 = vpop.f32.mrf.mxu0
    %v358 = vadd.f32 %v177, %v357
    %359 = vdwg.mxu0
    %v360 = vmax.f32 %v249, 0.0
    %v361 = vmax.f32 %v251, 0.0
    %v362 = vmax.f32 %v338, 0.0
    %v363 = vmax.f32 %v340, 0.0
    %v364 = vmax.f32 %v255, 0.0
    %v365 = vmax.f32 %v257, 0.0
    %v366 = vmax.f32 %v344, 0.0
    %v367 = vmax.f32 %v346, 0.0
    %v368 = vmax.f32 %v261, 0.0
    %v369 = vmax.f32 %v263, 0.0
    %v370 = vmax.f32 %v350, 0.0
    %v371 = vmax.f32 %v352, 0.0
    %v372 = vmax.f32 %v267, 0.0
    %v373 = vmax.f32 %v269, 0.0
    %v374 = vmax.f32 %v356, 0.0
    %v375 = vmax.f32 %v358, 0.0
    %v376 = vld [vmem:[%s3] sm:$0x3]
    %vm377 = vcmask 261120
    %v379 = vsel %vm377, %v376, 0
    %381 = vmatprep.subr.mxu0 0.0
    %382 = vmatpush1.msra.mxu0 0.0
    %383 = vmatprep.subr.mxu0 0.0
    %384 = vmatpush1.msra.mxu0 0.0
    %385 = vmatprep.subr.mxu0 0.0
    %386 = vmatpush1.msra.mxu0 0.0
    %387 = vmatprep.subr.mxu0 0.0
    %388 = vmatpush1.msra.mxu0 0.0
    %389 = vmatprep.subr.mxu0 0.0
    %390 = vmatpush1.msra.mxu0 0.0
    %391 = vmatprep.subr.mxu0 0.0
    %392 = vmatpush1.msra.mxu0 0.0
    %393 = vmatprep.subr.mxu0 0.0
    %394 = vmatpush1.msra.mxu0 0.0
    %395 = vmatprep.subr.mxu0 0.0
    %396 = vmatpush1.msra.mxu0 0.0
    %397 = vmatprep.subr.mxu0 0.0
    %398 = vmatpush1.msra.mxu0 0.0
    %399 = vmatprep.subr.mxu0 0.0
    %400 = vmatpush1.msra.mxu0 0.0
    %401 = vmatprep.subr.mxu0 0.0
    %402 = vmatpush1.msra.mxu0 0.0
    %403 = vmatprep.subr.mxu0 0.0
    %404 = vmatpush1.msra.mxu0 0.0
    %405 = vmatprep.subr.mxu0 %v373
    %406 = vmatpush1.msra.mxu0 %v372
    %407 = vmatprep.subr.mxu0 %v369
    %408 = vmatpush1.msra.mxu0 %v368
    %409 = vmatprep.subr.mxu0 %v365
    %410 = vmatpush1.msra.mxu0 %v364
    %411 = vmatprep.subr.mxu0 %v361
    %412 = vmatpush1.msra.mxu0 %v360
    %413 = vmatprep.subr.mxu0 0.0
    %414 = vmatpush2.msra.mxu0 0.0
    %415 = vmatprep.subr.mxu0 0.0
    %416 = vmatpush2.msra.mxu0 0.0
    %417 = vmatprep.subr.mxu0 0.0
    %418 = vmatpush2.msra.mxu0 0.0
    %419 = vmatprep.subr.mxu0 0.0
    %420 = vmatpush2.msra.mxu0 0.0
    %421 = vmatprep.subr.mxu0 0.0
    %422 = vmatpush2.msra.mxu0 0.0
    %423 = vmatprep.subr.mxu0 0.0
    %424 = vmatpush2.msra.mxu0 0.0
    %425 = vmatprep.subr.mxu0 0.0
    %426 = vmatpush2.msra.mxu0 0.0
    %427 = vmatprep.subr.mxu0 0.0
    %428 = vmatpush2.msra.mxu0 0.0
    %429 = vmatprep.subr.mxu0 0.0
    %430 = vmatpush2.msra.mxu0 0.0
    %431 = vmatprep.subr.mxu0 0.0
    %432 = vmatpush2.msra.mxu0 0.0
    %433 = vmatprep.subr.mxu0 0.0
    %434 = vmatpush2.msra.mxu0 0.0
    %435 = vmatprep.subr.mxu0 0.0
    %436 = vmatpush2.msra.mxu0 0.0
    %437 = vmatprep.subr.mxu0 0.0
    %438 = vmatpush2.msra.mxu0 0.0
    %439 = vmatprep.subr.mxu0 0.0
    %440 = vmatpush2.msra.mxu0 0.0
    %441 = vmatprep.subr.mxu0 0.0
    %442 = vmatpush2.msra.mxu0 0.0
    %443 = vmatprep.subr.mxu0 0.0
    %444 = vmatpush2.msra.mxu0 0.0
    %445 = vmatprep.mubr.f32.mxu0 0.0
    %446 = vmatmul.mubr.f32.gmra.mxu0 %v379
    %v447 = vpop.f32.mrf.mxu0
    %v448 = vadd.f32 0.0, %v447
    %v449 = vpop.f32.mrf.mxu0
    %v450 = vadd.f32 0.0, %v449
    %451 = vdwg.mxu0
    %452 = vmatprep.subr.mxu0 0.0
    %453 = vmatpush1.msra.mxu0 0.0
    %454 = vmatprep.subr.mxu0 0.0
    %455 = vmatpush1.msra.mxu0 0.0
    %456 = vmatprep.subr.mxu0 0.0
    %457 = vmatpush1.msra.mxu0 0.0
    %458 = vmatprep.subr.mxu0 0.0
    %459 = vmatpush1.msra.mxu0 0.0
    %460 = vmatprep.subr.mxu0 0.0
    %461 = vmatpush1.msra.mxu0 0.0
    %462 = vmatprep.subr.mxu0 0.0
    %463 = vmatpush1.msra.mxu0 0.0
    %464 = vmatprep.subr.mxu0 0.0
    %465 = vmatpush1.msra.mxu0 0.0
    %466 = vmatprep.subr.mxu0 0.0
    %467 = vmatpush1.msra.mxu0 0.0
    %468 = vmatprep.subr.mxu0 0.0
    %469 = vmatpush1.msra.mxu0 0.0
    %470 = vmatprep.subr.mxu0 0.0
    %471 = vmatpush1.msra.mxu0 0.0
    %472 = vmatprep.subr.mxu0 0.0
    %473 = vmatpush1.msra.mxu0 0.0
    %474 = vmatprep.subr.mxu0 0.0
    %475 = vmatpush1.msra.mxu0 0.0
    %476 = vmatprep.subr.mxu0 %v375
    %477 = vmatpush1.msra.mxu0 %v374
    %478 = vmatprep.subr.mxu0 %v371
    %479 = vmatpush1.msra.mxu0 %v370
    %480 = vmatprep.subr.mxu0 %v367
    %481 = vmatpush1.msra.mxu0 %v366
    %482 = vmatprep.subr.mxu0 %v363
    %483 = vmatpush1.msra.mxu0 %v362
    %484 = vmatprep.subr.mxu0 0.0
    %485 = vmatpush2.msra.mxu0 0.0
    %486 = vmatprep.subr.mxu0 0.0
    %487 = vmatpush2.msra.mxu0 0.0
    %488 = vmatprep.subr.mxu0 0.0
    %489 = vmatpush2.msra.mxu0 0.0
    %490 = vmatprep.subr.mxu0 0.0
    %491 = vmatpush2.msra.mxu0 0.0
    %492 = vmatprep.subr.mxu0 0.0
    %493 = vmatpush2.msra.mxu0 0.0
    %494 = vmatprep.subr.mxu0 0.0
    %495 = vmatpush2.msra.mxu0 0.0
    %496 = vmatprep.subr.mxu0 0.0
    %497 = vmatpush2.msra.mxu0 0.0
    %498 = vmatprep.subr.mxu0 0.0
    %499 = vmatpush2.msra.mxu0 0.0
    %500 = vmatprep.subr.mxu0 0.0
    %501 = vmatpush2.msra.mxu0 0.0
    %502 = vmatprep.subr.mxu0 0.0
    %503 = vmatpush2.msra.mxu0 0.0
    %504 = vmatprep.subr.mxu0 0.0
    %505 = vmatpush2.msra.mxu0 0.0
    %506 = vmatprep.subr.mxu0 0.0
    %507 = vmatpush2.msra.mxu0 0.0
    %508 = vmatprep.subr.mxu0 0.0
    %509 = vmatpush2.msra.mxu0 0.0
    %510 = vmatprep.subr.mxu0 0.0
    %511 = vmatpush2.msra.mxu0 0.0
    %512 = vmatprep.subr.mxu0 0.0
    %513 = vmatpush2.msra.mxu0 0.0
    %514 = vmatprep.subr.mxu0 0.0
    %515 = vmatpush2.msra.mxu0 0.0
    %516 = vmatprep.mubr.f32.mxu0 0.0
    %517 = vmatmul.mubr.f32.gmra.mxu0 %v379
    %v518 = vpop.f32.mrf.mxu0
    %v519 = vadd.f32 0.0, %v518
    %v520 = vpop.f32.mrf.mxu0
    %v521 = vadd.f32 0.0, %v520
    %522 = vdwg.mxu0
    %v523 = vld [vmem:[%s4] sm:$0xff]
    %v524 = vld [vmem:[%s4 + $0x8] sm:$0xff]
    %v525 = vld [vmem:[%s4 + $0x10] sm:$0xff]
    %v526 = vld [vmem:[%s4 + $0x18] sm:$0xff]
    %v527 = vld [vmem:[%s4 + $0x20] sm:$0xff]
    %v528 = vld [vmem:[%s4 + $0x28] sm:$0xff]
    %v529 = vld [vmem:[%s4 + $0x30] sm:$0xff]
    %v530 = vld [vmem:[%s4 + $0x38] sm:$0xff]
    %v531 = vld [vmem:[%s4 + $0x40] sm:$0xff]
    %v532 = vld [vmem:[%s4 + $0x48] sm:$0xff]
    %v533 = vld [vmem:[%s4 + $0x50] sm:$0xff]
    %v534 = vld [vmem:[%s4 + $0x58] sm:$0xff]
    %v535 = vld [vmem:[%s4 + $0x60] sm:$0xff]
    %v536 = vld [vmem:[%s4 + $0x68] sm:$0xff]
    %v537 = vld [vmem:[%s4 + $0x70] sm:$0xff]
    %v538 = vld [vmem:[%s4 + $0x78] sm:$0xff]
    %v539 = vld [vmem:[%s4 + $0x80] sm:$0xff]
    %v540 = vld [vmem:[%s4 + $0x88] sm:$0xff]
    %v541 = vld [vmem:[%s4 + $0x90] sm:$0xff]
    %v542 = vld [vmem:[%s4 + $0x98] sm:$0xff]
    %v543 = vld [vmem:[%s4 + $0xa0] sm:$0xff]
    %v544 = vld [vmem:[%s4 + $0xa8] sm:$0xff]
    %v545 = vld [vmem:[%s4 + $0xb0] sm:$0xff]
    %v546 = vld [vmem:[%s4 + $0xb8] sm:$0xff]
    %v547 = vld [vmem:[%s4 + $0xc0] sm:$0xff]
    %v548 = vld [vmem:[%s4 + $0xc8] sm:$0xff]
    %v549 = vld [vmem:[%s4 + $0xd0] sm:$0xff]
    %v550 = vld [vmem:[%s4 + $0xd8] sm:$0xff]
    %v551 = vld [vmem:[%s4 + $0xe0] sm:$0xff]
    %v552 = vld [vmem:[%s4 + $0xe8] sm:$0xff]
    %v553 = vld [vmem:[%s4 + $0xf0] sm:$0xff]
    %v554 = vld [vmem:[%s4 + $0xf8] sm:$0xff]
    %v555 = vld [vmem:[%s4 + $0x100] sm:$0xff]
    %v556 = vld [vmem:[%s4 + $0x108] sm:$0xff]
    %v557 = vld [vmem:[%s4 + $0x110] sm:$0xff]
    %v558 = vld [vmem:[%s4 + $0x118] sm:$0xff]
    %v559 = vld [vmem:[%s4 + $0x120] sm:$0xff]
    %v560 = vld [vmem:[%s4 + $0x128] sm:$0xff]
    %v561 = vld [vmem:[%s4 + $0x130] sm:$0xff]
    %v562 = vld [vmem:[%s4 + $0x138] sm:$0xff]
    %v563 = vld [vmem:[%s4 + $0x140] sm:$0xff]
    %v564 = vld [vmem:[%s4 + $0x148] sm:$0xff]
    %v565 = vld [vmem:[%s4 + $0x150] sm:$0xff]
    %v566 = vld [vmem:[%s4 + $0x158] sm:$0xff]
    %v567 = vld [vmem:[%s4 + $0x160] sm:$0xff]
    %v568 = vld [vmem:[%s4 + $0x168] sm:$0xff]
    %v569 = vld [vmem:[%s4 + $0x170] sm:$0xff]
    %v570 = vld [vmem:[%s4 + $0x178] sm:$0xff]
    %v571 = vld [vmem:[%s4 + $0x180] sm:$0xff]
    %v572 = vld [vmem:[%s4 + $0x188] sm:$0xff]
    %v573 = vld [vmem:[%s4 + $0x190] sm:$0xff]
    %v574 = vld [vmem:[%s4 + $0x198] sm:$0xff]
    %v575 = vld [vmem:[%s4 + $0x1a0] sm:$0xff]
    %v576 = vld [vmem:[%s4 + $0x1a8] sm:$0xff]
    %v577 = vld [vmem:[%s4 + $0x1b0] sm:$0xff]
    %v578 = vld [vmem:[%s4 + $0x1b8] sm:$0xff]
    %v579 = vld [vmem:[%s4 + $0x1c0] sm:$0xff]
    %v580 = vld [vmem:[%s4 + $0x1c8] sm:$0xff]
    %v581 = vld [vmem:[%s4 + $0x1d0] sm:$0xff]
    %v582 = vld [vmem:[%s4 + $0x1d8] sm:$0xff]
    %v583 = vld [vmem:[%s4 + $0x1e0] sm:$0xff]
    %v584 = vld [vmem:[%s4 + $0x1e8] sm:$0xff]
    %v585 = vld [vmem:[%s4 + $0x1f0] sm:$0xff]
    %v586 = vld [vmem:[%s4 + $0x1f8] sm:$0xff]
    %v587 = vld [vmem:[%s5] sm:$0x1]
    %v589 = vlaneseq
    %v590 = vshrl.u32 %v589, 7
    %v591 = vsub.s32 0, %v590
    %v592 = vrot.slane %v587, %v591
    %594 = vmatprep.subr.mxu0 0.0
    %595 = vmatpush1.msra.mxu0 %v538
    %596 = vmatprep.subr.mxu0 0.0
    %597 = vmatpush1.msra.mxu0 %v537
    %598 = vmatprep.subr.mxu0 0.0
    %599 = vmatpush1.msra.mxu0 %v536
    %600 = vmatprep.subr.mxu0 0.0
    %601 = vmatpush1.msra.mxu0 %v535
    %602 = vmatprep.subr.mxu0 0.0
    %603 = vmatpush1.msra.mxu0 %v534
    %604 = vmatprep.subr.mxu0 0.0
    %605 = vmatpush1.msra.mxu0 %v533
    %606 = vmatprep.subr.mxu0 0.0
    %607 = vmatpush1.msra.mxu0 %v532
    %608 = vmatprep.subr.mxu0 0.0
    %609 = vmatpush1.msra.mxu0 %v531
    %610 = vmatprep.subr.mxu0 0.0
    %611 = vmatpush1.msra.mxu0 %v530
    %612 = vmatprep.subr.mxu0 0.0
    %613 = vmatpush1.msra.mxu0 %v529
    %614 = vmatprep.subr.mxu0 0.0
    %615 = vmatpush1.msra.mxu0 %v528
    %616 = vmatprep.subr.mxu0 0.0
    %617 = vmatpush1.msra.mxu0 %v527
    %618 = vmatprep.subr.mxu0 0.0
    %619 = vmatpush1.msra.mxu0 %v526
    %620 = vmatprep.subr.mxu0 0.0
    %621 = vmatpush1.msra.mxu0 %v525
    %622 = vmatprep.subr.mxu0 0.0
    %623 = vmatpush1.msra.mxu0 %v524
    %624 = vmatprep.subr.mxu0 0.0
    %625 = vmatpush1.msra.mxu0 %v523
    %626 = vmatprep.subr.mxu0 0.0
    %627 = vmatpush2.msra.mxu0 %v554
    %628 = vmatprep.subr.mxu0 0.0
    %629 = vmatpush2.msra.mxu0 %v553
    %630 = vmatprep.subr.mxu0 0.0
    %631 = vmatpush2.msra.mxu0 %v552
    %632 = vmatprep.subr.mxu0 0.0
    %633 = vmatpush2.msra.mxu0 %v551
    %634 = vmatprep.subr.mxu0 0.0
    %635 = vmatpush2.msra.mxu0 %v550
    %636 = vmatprep.subr.mxu0 0.0
    %637 = vmatpush2.msra.mxu0 %v549
    %638 = vmatprep.subr.mxu0 0.0
    %639 = vmatpush2.msra.mxu0 %v548
    %640 = vmatprep.subr.mxu0 0.0
    %641 = vmatpush2.msra.mxu0 %v547
    %642 = vmatprep.subr.mxu0 0.0
    %643 = vmatpush2.msra.mxu0 %v546
    %644 = vmatprep.subr.mxu0 0.0
    %645 = vmatpush2.msra.mxu0 %v545
    %646 = vmatprep.subr.mxu0 0.0
    %647 = vmatpush2.msra.mxu0 %v544
    %648 = vmatprep.subr.mxu0 0.0
    %649 = vmatpush2.msra.mxu0 %v543
    %650 = vmatprep.subr.mxu0 0.0
    %651 = vmatpush2.msra.mxu0 %v542
    %652 = vmatprep.subr.mxu0 0.0
    %653 = vmatpush2.msra.mxu0 %v541
    %654 = vmatprep.subr.mxu0 0.0
    %655 = vmatpush2.msra.mxu0 %v540
    %656 = vmatprep.subr.mxu0 0.0
    %657 = vmatpush2.msra.mxu0 %v539
    %658 = vmatprep.mubr.f32.mxu0 %v450
    %659 = vmatmul.mubr.f32.gmra.mxu0 %v448
    %v660 = vpop.f32.mrf.mxu0
    %v661 = vadd.f32 %v592, %v660
    %v662 = vpop.f32.mrf.mxu0
    %663 = vdwg.mxu0
    %664 = vmatprep.subr.mxu0 0.0
    %665 = vmatpush1.msra.mxu0 %v570
    %666 = vmatprep.subr.mxu0 0.0
    %667 = vmatpush1.msra.mxu0 %v569
    %668 = vmatprep.subr.mxu0 0.0
    %669 = vmatpush1.msra.mxu0 %v568
    %670 = vmatprep.subr.mxu0 0.0
    %671 = vmatpush1.msra.mxu0 %v567
    %672 = vmatprep.subr.mxu0 0.0
    %673 = vmatpush1.msra.mxu0 %v566
    %674 = vmatprep.subr.mxu0 0.0
    %675 = vmatpush1.msra.mxu0 %v565
    %676 = vmatprep.subr.mxu0 0.0
    %677 = vmatpush1.msra.mxu0 %v564
    %678 = vmatprep.subr.mxu0 0.0
    %679 = vmatpush1.msra.mxu0 %v563
    %680 = vmatprep.subr.mxu0 0.0
    %681 = vmatpush1.msra.mxu0 %v562
    %682 = vmatprep.subr.mxu0 0.0
    %683 = vmatpush1.msra.mxu0 %v561
    %684 = vmatprep.subr.mxu0 0.0
    %685 = vmatpush1.msra.mxu0 %v560
    %686 = vmatprep.subr.mxu0 0.0
    %687 = vmatpush1.msra.mxu0 %v559
    %688 = vmatprep.subr.mxu0 0.0
    %689 = vmatpush1.msra.mxu0 %v558
    %690 = vmatprep.subr.mxu0 0.0
    %691 = vmatpush1.msra.mxu0 %v557
    %692 = vmatprep.subr.mxu0 0.0
    %693 = vmatpush1.msra.mxu0 %v556
    %694 = vmatprep.subr.mxu0 0.0
    %695 = vmatpush1.msra.mxu0 %v555
    %696 = vmatprep.subr.mxu0 0.0
    %697 = vmatpush2.msra.mxu0 %v586
    %698 = vmatprep.subr.mxu0 0.0
    %699 = vmatpush2.msra.mxu0 %v585
    %700 = vmatprep.subr.mxu0 0.0
    %701 = vmatpush2.msra.mxu0 %v584
    %702 = vmatprep.subr.mxu0 0.0
    %703 = vmatpush2.msra.mxu0 %v583
    %704 = vmatprep.subr.mxu0 0.0
    %705 = vmatpush2.msra.mxu0 %v582
    %706 = vmatprep.subr.mxu0 0.0
    %707 = vmatpush2.msra.mxu0 %v581
    %708 = vmatprep.subr.mxu0 0.0
    %709 = vmatpush2.msra.mxu0 %v580
    %710 = vmatprep.subr.mxu0 0.0
    %711 = vmatpush2.msra.mxu0 %v579
    %712 = vmatprep.subr.mxu0 0.0
    %713 = vmatpush2.msra.mxu0 %v578
    %714 = vmatprep.subr.mxu0 0.0
    %715 = vmatpush2.msra.mxu0 %v577
    %716 = vmatprep.subr.mxu0 0.0
    %717 = vmatpush2.msra.mxu0 %v576
    %718 = vmatprep.subr.mxu0 0.0
    %719 = vmatpush2.msra.mxu0 %v575
    %720 = vmatprep.subr.mxu0 0.0
    %721 = vmatpush2.msra.mxu0 %v574
    %722 = vmatprep.subr.mxu0 0.0
    %723 = vmatpush2.msra.mxu0 %v573
    %724 = vmatprep.subr.mxu0 0.0
    %725 = vmatpush2.msra.mxu0 %v572
    %726 = vmatprep.subr.mxu0 0.0
    %727 = vmatpush2.msra.mxu0 %v571
    %728 = vmatprep.mubr.f32.mxu0 %v521
    %729 = vmatmul.mubr.f32.gmra.mxu0 %v519
    %v730 = vpop.f32.mrf.mxu0
    %v731 = vadd.f32 %v661, %v730
    %v732 = vpop.f32.mrf.mxu0
    %733 = vdwg.mxu0
    %734 = vst [vmem:[#allocation2] sm:$0x3] %v731
    // Predicated region
    $region26: #{model_arch_forward.1} parent=1 // pred_check
      _
    $region27: #{model_arch_forward.1} parent=1 // pred_check_branch
      %736 = sbr.rel (0) target = $region29
    $region28: #{model_arch_forward.1} parent=1 // pred_region
      %s738 = ssub.s32 32, 32
      %739 = vsyncadd [#allocation3], %s738
      %s741 = sshll.u32 [#allocation2], 4
      %s742 = int_to_ptr.vmem [resolvable:$true] %s741
      %744 = dma.vmem_to_hbm [thread:$0]  %s742, 32, %s6, [#allocation3]
    $region29: #{model_arch_forward.1} parent=1 // pred_fallthru
      _
    // Predicated region
    $region30: #{model_arch_forward.1} parent=1 // pred_check
      _
    $region31: #{model_arch_forward.1} parent=1 // pred_check_branch
      %746 = sbr.rel (0) target = $region33
    $region32: #{model_arch_forward.1} parent=1 // pred_region
      %747 = dma.done [#allocation3], 32
    $region33: #{model_arch_forward.1} parent=1 // pred_fallthru
      _
    %748 = vsyncpa [#allocation3], 1

</llo_original>
